<compile_context>
chip_gen: v6e
topology: v6e:2x2x1
jax: 0.10.0
libtpu: 0.0.40
codegen_flags: <defaults>
</compile_context>

<pallas_src>
import functools

import jax
import jax.numpy as jnp
from jax.experimental import pallas as pl
from jax.experimental.pallas import tpu as pltpu


D_PAD = 128        # hidden width 100 zero-padded to the full 128-lane width
MIN_TILE_N = 512   # smallest batch tile (multiple of 128 lanes)
MAX_TILE_N = 8192  # VMEM-safe cap (h1+h2 f32 ~ 8 MB at 8192 rows)


def _round_up(a, b):
    return ((a + b - 1) // b) * b


def _cdiv(a, b):
    return (a + b - 1) // b


def _choose_tile_n(n):
    """Big tiles to amortize per-step overhead; >=2 tiles when the batch
    allows it so dimension_semantics=("parallel",) can use both v7x TCs."""
    n512 = _round_up(max(n, 1), MIN_TILE_N)
    if n512 <= MIN_TILE_N:
        return MIN_TILE_N
    half = _round_up(_cdiv(n512, 2), MIN_TILE_N)
    return min(MAX_TILE_N, half)


def _vpu_supports_bf16():
    """v6e / v7x VPUs are bf16-capable; v2-v5 are not."""
    try:
        kind = jax.devices()[0].device_kind.lower()
    except Exception:
        return False
    return not any(tag in kind for tag in ("v2", "v3", "v4", "v5"))


def mlp_kernel(x_ref, w1_ref, b1_ref, w2t_ref, b2_ref, w3_ref, b3_ref, o_ref,
               *, mxu_dtype, ew_dtype):
    # x_ref  : (1, TILE_N)       f32        lane-dense batch row (pipelined)
    # w1_ref : (D_PAD, 1)        ew_dtype   first-layer weight column (fan_in=1)
    # b1_ref : (D_PAD, 1)        ew_dtype
    # w2t_ref: (D_PAD, D_PAD)    mxu_dtype  W2^T
    # b2_ref : (D_PAD, 1)        f32
    # w3_ref : (1, D_PAD)        f32        W3^T row (fan_out=1)
    # b3_ref : (1, 1)            f32
    # o_ref  : (1, TILE_N)       f32        lane-dense output row
    x_row = x_ref[...].astype(ew_dtype)                          # (1, TILE_N)

    # Layer 1 (K = 1): VPU broadcast FMA + ReLU, keeps the MXU free.
    h1t = jnp.maximum(w1_ref[...] * x_row + b1_ref[...], 0.0)    # (D_PAD, TILE_N)

    # Layer 2: the only big matmul (128 x 128 weights) on the MXU, f32 acc.
    h2t = jnp.dot(w2t_ref[...], h1t.astype(mxu_dtype),
                  preferred_element_type=jnp.float32)            # (D_PAD, TILE_N)
    h2t = jnp.maximum(h2t + b2_ref[...], 0.0)

    # Layer 3 (N_out = 1): tiny 1-row matmul, already lane-dense output.
    out_row = jnp.dot(w3_ref[...], h2t,
                      preferred_element_type=jnp.float32)        # (1, TILE_N)
    o_ref[...] = out_row + b3_ref[...]


def _prep_params(params, mxu_dtype, ew_dtype):
    """Zero-pad feature dims 100 -> 128 and lay weights out transposed."""
    w1, b1, w2, b2, w3, b3 = params
    d = w2.shape[0]
    pad = D_PAD - d
    w1c = jnp.pad(w1, ((0, 0), (0, pad))).reshape(D_PAD, 1).astype(ew_dtype)
    b1c = jnp.pad(b1, ((0, 0), (0, pad))).reshape(D_PAD, 1).astype(ew_dtype)
    w2t = jnp.pad(w2, ((0, pad), (0, pad))).T.astype(mxu_dtype)   # (128, 128)
    b2c = jnp.pad(b2, ((0, 0), (0, pad))).reshape(D_PAD, 1)       # f32
    w3r = jnp.pad(w3, ((0, pad), (0, 0))).reshape(1, D_PAD)       # f32 row
    b3s = b3.reshape(1, 1)
    return w1c, b1c, w2t, b2c, w3r, b3s


def example_net_forward(x, params, *, use_bf16_matmul=True, bf16_layer1=None):
    """x: (N, 1) float32 -> (N, 1) float32 (matches ExampleNet.forward)."""
    n = x.shape[0]
    tile_n = _choose_tile_n(n)
    n_tiles = _cdiv(n, tile_n)
    n_pad = n_tiles * tile_n

    if bf16_layer1 is None:
        bf16_layer1 = use_bf16_matmul and _vpu_supports_bf16()
    if not use_bf16_matmul:
        bf16_layer1 = False
    mxu_dtype = jnp.bfloat16 if use_bf16_matmul else jnp.float32
    ew_dtype = jnp.bfloat16 if bf16_layer1 else jnp.float32

    x_row = jnp.pad(x.astype(jnp.float32).reshape(1, n),
                    ((0, 0), (0, n_pad - n)))
    w1c, b1c, w2t, b2c, w3r, b3s = _prep_params(params, mxu_dtype, ew_dtype)

    kernel = functools.partial(mlp_kernel, mxu_dtype=mxu_dtype,
                               ew_dtype=ew_dtype)
    resident = lambda i: (0, 0)   # same block every step -> stays in VMEM

    out_row = pl.pallas_call(
        kernel,
        out_shape=jax.ShapeDtypeStruct((1, n_pad), jnp.float32),
        grid=(n_tiles,),
        in_specs=[
            pl.BlockSpec((1, tile_n), lambda i: (0, i)),   # x row (pipelined)
            pl.BlockSpec((D_PAD, 1), resident),            # w1 column
            pl.BlockSpec((D_PAD, 1), resident),            # b1 column
            pl.BlockSpec((D_PAD, D_PAD), resident),        # W2^T
            pl.BlockSpec((D_PAD, 1), resident),            # b2 column
            pl.BlockSpec((1, D_PAD), resident),            # W3^T row
            pl.BlockSpec((1, 1), resident),                # b3
        ],
        out_specs=pl.BlockSpec((1, tile_n), lambda i: (0, i)),
        compiler_params=pltpu.CompilerParams(
            dimension_semantics=("parallel",)),
    )(x_row, w1c, b1c, w2t, b2c, w3r, b3s)

    # (1, N_pad) lane-dense slab -> (N, 1) column, drop batch padding.
    return out_row.reshape(n_pad, 1)[:n]


def init_params(key):
    """Deterministic init matching PyTorch Linear shapes.

    PyTorch stores weight as (out, in); we store the transpose (in, out) so
    the reference computes x @ W directly.  Uniform(-1/sqrt(fan_in), +...),
    like torch.nn.Linear's default init.
    """
    def linear_init(k, fan_in, fan_out):
        kw, kb = jax.random.split(k)
        bound = 1.0 / jnp.sqrt(jnp.float32(fan_in))
        w = jax.random.uniform(kw, (fan_in, fan_out), jnp.float32, -bound, bound)
        b = jax.random.uniform(kb, (1, fan_out), jnp.float32, -bound, bound)
        return w, b

    k1, k2, k3 = jax.random.split(key, 3)
    w1, b1 = linear_init(k1, 1, 100)
    w2, b2 = linear_init(k2, 100, 100)
    w3, b3 = linear_init(k3, 100, 1)
    return (w1, b1, w2, b2, w3, b3)


def reference_forward(x, params):
    w1, b1, w2, b2, w3, b3 = params
    h1 = jnp.maximum(x @ w1 + b1, 0.0)
    h2 = jnp.maximum(h1 @ w2 + b2, 0.0)
    return h2 @ w3 + b3


if __name__ == "__main__":
    key = jax.random.PRNGKey(0)
    k_params, k_x1, k_x2 = jax.random.split(key, 3)
    params = init_params(k_params)

    # Small batch (single grid step), pure-f32 path: exact check.
    batch = 8
    x = jax.random.normal(k_x1, (batch, 1), jnp.float32)
    ref = reference_forward(x, params)
    out = jax.block_until_ready(
        example_net_forward(x, params, use_bf16_matmul=False))
    assert out.shape == (batch, 1)
    assert jnp.allclose(out, ref, atol=1e-5, rtol=1e-5), "f32 mismatch (small batch)"

    # Larger, non-multiple-of-tile batch: exercises >=2 pipelined grid steps.
    batch2 = 1040
    x2 = jax.random.normal(k_x2, (batch2, 1), jnp.float32)
    ref2 = reference_forward(x2, params)

    out2_f32 = jax.block_until_ready(
        example_net_forward(x2, params, use_bf16_matmul=False))
    assert out2_f32.shape == (batch2, 1)
    assert jnp.allclose(out2_f32, ref2, atol=1e-5, rtol=1e-5), "f32 mismatch (grid batch)"

    # Default fast path: bf16 MXU operands (+ bf16 layer-1 on v6e/v7x), f32 acc.
    out2 = jax.block_until_ready(example_net_forward(x2, params))
    assert out2.shape == (batch2, 1)
    assert jnp.allclose(out2, ref2, atol=5e-2, rtol=5e-2), "bf16 mismatch"

    print("KERNEL_OK")
</pallas_src>

<mosaic_0001>
module attributes {stable_mosaic.version = 11 : i64} {
  func.func @mlp_kernel(%arg0: i32, %arg1: memref<1x512xf32, #tpu.memory_space<vmem>>, %arg2: memref<128x1xf32, #tpu.memory_space<vmem>>, %arg3: memref<128x1xf32, #tpu.memory_space<vmem>>, %arg4: memref<128x128xf32, #tpu.memory_space<vmem>>, %arg5: memref<128x1xf32, #tpu.memory_space<vmem>>, %arg6: memref<1x128xf32, #tpu.memory_space<vmem>>, %arg7: memref<1x1xf32, #tpu.memory_space<vmem>>, %arg8: memref<1x512xf32, #tpu.memory_space<vmem>>) attributes {dimension_semantics = [#tpu.dimension_semantics<parallel>], iteration_bounds = array<i64: 1>, scalar_prefetch = 0 : i64, scratch_operands = 0 : i64, tpu.core_type = #tpu.core_type<tc>, window_params = [{transform_indices = @transform_0, window_bounds = array<i64: 1, 512>}, {pipeline_mode = #tpu.pipeline_mode<synchronous>, transform_indices = @transform_1, window_bounds = array<i64: 128, 1>}, {pipeline_mode = #tpu.pipeline_mode<synchronous>, transform_indices = @transform_2, window_bounds = array<i64: 128, 1>}, {pipeline_mode = #tpu.pipeline_mode<synchronous>, transform_indices = @transform_3, window_bounds = array<i64: 128, 128>}, {pipeline_mode = #tpu.pipeline_mode<synchronous>, transform_indices = @transform_4, window_bounds = array<i64: 128, 1>}, {pipeline_mode = #tpu.pipeline_mode<synchronous>, transform_indices = @transform_5, window_bounds = array<i64: 1, 128>}, {pipeline_mode = #tpu.pipeline_mode<synchronous>, transform_indices = @transform_6, window_bounds = array<i64: 1, 1>}, {transform_indices = @transform_7, window_bounds = array<i64: 1, 512>}]} {
    %c0 = arith.constant 0 : index
    %c0_0 = arith.constant 0 : index
    %0 = vector.load %arg1[%c0, %c0_0] : memref<1x512xf32, #tpu.memory_space<vmem>>, vector<1x512xf32>
    %c0_1 = arith.constant 0 : index
    %c0_2 = arith.constant 0 : index
    %1 = vector.load %arg2[%c0_1, %c0_2] : memref<128x1xf32, #tpu.memory_space<vmem>>, vector<128x1xf32>
    %2 = vector.broadcast %1 : vector<128x1xf32> to vector<128x512xf32>
    %3 = vector.broadcast %0 : vector<1x512xf32> to vector<128x512xf32>
    %4 = arith.mulf %2, %3 : vector<128x512xf32>
    %c0_3 = arith.constant 0 : index
    %c0_4 = arith.constant 0 : index
    %5 = vector.load %arg3[%c0_3, %c0_4] : memref<128x1xf32, #tpu.memory_space<vmem>>, vector<128x1xf32>
    %6 = vector.broadcast %5 : vector<128x1xf32> to vector<128x512xf32>
    %7 = arith.addf %4, %6 : vector<128x512xf32>
    %cst = arith.constant 0.000000e+00 : f32
    %8 = vector.broadcast %cst : f32 to vector<128x512xf32>
    %9 = arith.maximumf %7, %8 : vector<128x512xf32>
    %c0_5 = arith.constant 0 : index
    %c0_6 = arith.constant 0 : index
    %10 = vector.load %arg4[%c0_5, %c0_6] : memref<128x128xf32, #tpu.memory_space<vmem>>, vector<128x128xf32>
    %cst_7 = arith.constant dense<0.000000e+00> : vector<128x512xf32>
    %11 = tpu.matmul %10, %9, %cst_7 {dimension_numbers = #tpu.dot_dimension_numbers<[1], [0], [0], [1], [0, 0, 1, 1], [], []>} : vector<128x128xf32>, vector<128x512xf32>, vector<128x512xf32> -> vector<128x512xf32>
    %c0_8 = arith.constant 0 : index
    %c0_9 = arith.constant 0 : index
    %12 = vector.load %arg5[%c0_8, %c0_9] : memref<128x1xf32, #tpu.memory_space<vmem>>, vector<128x1xf32>
    %13 = vector.broadcast %12 : vector<128x1xf32> to vector<128x512xf32>
    %14 = arith.addf %11, %13 : vector<128x512xf32>
    %cst_10 = arith.constant 0.000000e+00 : f32
    %15 = vector.broadcast %cst_10 : f32 to vector<128x512xf32>
    %16 = arith.maximumf %14, %15 : vector<128x512xf32>
    %c0_11 = arith.constant 0 : index
    %c0_12 = arith.constant 0 : index
    %17 = vector.load %arg6[%c0_11, %c0_12] : memref<1x128xf32, #tpu.memory_space<vmem>>, vector<1x128xf32>
    %cst_13 = arith.constant dense<0.000000e+00> : vector<1x512xf32>
    %18 = tpu.matmul %17, %16, %cst_13 {dimension_numbers = #tpu.dot_dimension_numbers<[1], [0], [0], [1], [0, 0, 1, 1], [], []>} : vector<1x128xf32>, vector<128x512xf32>, vector<1x512xf32> -> vector<1x512xf32>
    %c0_14 = arith.constant 0 : index
    %c0_15 = arith.constant 0 : index
    %19 = vector.load %arg7[%c0_14, %c0_15] : memref<1x1xf32, #tpu.memory_space<vmem>>, vector<1x1xf32>
    %20 = vector.broadcast %19 : vector<1x1xf32> to vector<1x512xf32>
    %21 = arith.addf %18, %20 : vector<1x512xf32>
    %c0_16 = arith.constant 0 : index
    %c0_17 = arith.constant 0 : index
    %22 = vector.load %arg8[%c0_16, %c0_17] : memref<1x512xf32, #tpu.memory_space<vmem>>, vector<1x512xf32>
    tpu.vector_store %arg8[%c0_16, %c0_17], %21 {strides = array<i32>} : memref<1x512xf32, #tpu.memory_space<vmem>>, vector<1x512xf32>,
    return
  }
  func.func @transform_0(%arg0: i32) -> (i32, i32) {
    %c0_i32 = arith.constant 0 : i32
    %c0_i32_0 = arith.constant 0 : i32
    return %c0_i32, %arg0 : i32, i32
  }
  func.func @transform_1(%arg0: i32) -> (i32, i32) {
    %c0_i32 = arith.constant 0 : i32
    %c0_i32_0 = arith.constant 0 : i32
    %c0_i32_1 = arith.constant 0 : i32
    return %c0_i32, %c0_i32_0 : i32, i32
  }
  func.func @transform_2(%arg0: i32) -> (i32, i32) {
    %c0_i32 = arith.constant 0 : i32
    %c0_i32_0 = arith.constant 0 : i32
    %c0_i32_1 = arith.constant 0 : i32
    return %c0_i32, %c0_i32_0 : i32, i32
  }
  func.func @transform_3(%arg0: i32) -> (i32, i32) {
    %c0_i32 = arith.constant 0 : i32
    %c0_i32_0 = arith.constant 0 : i32
    %c0_i32_1 = arith.constant 0 : i32
    return %c0_i32, %c0_i32_0 : i32, i32
  }
  func.func @transform_4(%arg0: i32) -> (i32, i32) {
    %c0_i32 = arith.constant 0 : i32
    %c0_i32_0 = arith.constant 0 : i32
    %c0_i32_1 = arith.constant 0 : i32
    return %c0_i32, %c0_i32_0 : i32, i32
  }
  func.func @transform_5(%arg0: i32) -> (i32, i32) {
    %c0_i32 = arith.constant 0 : i32
    %c0_i32_0 = arith.constant 0 : i32
    %c0_i32_1 = arith.constant 0 : i32
    return %c0_i32, %c0_i32_0 : i32, i32
  }
  func.func @transform_6(%arg0: i32) -> (i32, i32) {
    %c0_i32 = arith.constant 0 : i32
    %c0_i32_0 = arith.constant 0 : i32
    %c0_i32_1 = arith.constant 0 : i32
    return %c0_i32, %c0_i32_0 : i32, i32
  }
  func.func @transform_7(%arg0: i32) -> (i32, i32) {
    %c0_i32 = arith.constant 0 : i32
    %c0_i32_0 = arith.constant 0 : i32
    return %c0_i32, %arg0 : i32, i32
  }
}

</mosaic_0001>

<llo_original>
// kernel: tpu_custom_call.1
$region0: #{tpu_custom_call.1}
  #allocation0 [shape = 'u32[]', space=smem, size = 0x4, offset = 0x4, fixed_abs, tag = 'smem constant byte address 0x4 - core index']
  #allocation1 [shape = 'u32[144,128]{1,0:T(1,128)}', space=vmem, size = 0x12000, scoped, tag = 'internal scratch']
  #allocation2 [shape = 'f32[1,1]{1,0:T(1,128)S(1)}', space=vmem, size = 0x200, scoped, tag = 'scoped memory for tpu_custom_call.1']
  %s0 = inlined_call_operand.vmem [shape: f32[1,512], index: 0, kind: input, shape index: {}]
  %s1 = inlined_call_operand.vmem [shape: f32[128,1], index: 1, kind: input, shape index: {}]
  %s2 = inlined_call_operand.vmem [shape: f32[128,1], index: 2, kind: input, shape index: {}]
  %s3 = inlined_call_operand.vmem [shape: f32[128,128], index: 3, kind: input, shape index: {}]
  %s4 = inlined_call_operand.vmem [shape: f32[128,1], index: 4, kind: input, shape index: {}]
  %s5 = inlined_call_operand.vmem [shape: f32[1,128], index: 5, kind: input, shape index: {}]
  %s6 = inlined_call_operand.<no memory space> [shape: f32[1,1], index: 6, kind: input, shape index: {}]
  %s7 = inlined_call_operand.hbm [shape: f32[1,512], index: 7, kind: output, shape index: {}]
  %s8 = sld [smem:[#allocation0]]
  $region38: #{tpu_custom_call.1} parent=0
    _
  %s10 = ssub.s32 1, %s8
  %s11 = scalar_select 0, %s10, %s8
  %v12 = vstv %s6
  %13 = vst [vmem:[#allocation2] sm:$0x1] %v12
  $region1: #{tpu_custom_call.1} parent=0
    #allocation3 [shape = 'u8[2048]{0}', space=vmem, size = 0x800, scoped, tag = 'output window, operand 0, single buffered']
    #allocation4 [shape = 's32[1]{0}', space=sflag, size = 0x4, scoped, tag = 'scoped memory for tpu_custom_call.1']
    %14 = vsyncpa [#allocation4], 0
    // Predicated region
    $region2: #{tpu_custom_call.1} parent=1 // pred_check
      _
    $region3: #{tpu_custom_call.1} parent=1 // pred_check_branch
      %16 = sbr.rel (0) target = $region5
    $region4: #{tpu_custom_call.1} parent=1 // pred_region
      _
    $region5: #{tpu_custom_call.1} parent=1 // pred_fallthru
      _
    // Predicated region
    $region6: #{tpu_custom_call.1} parent=1 // pred_check
      _
    $region7: #{tpu_custom_call.1} parent=1 // pred_check_branch
      %18 = sbr.rel (0) target = $region9
    $region8: #{tpu_custom_call.1} parent=1 // pred_region
      _
    $region9: #{tpu_custom_call.1} parent=1 // pred_fallthru
      _
    // Predicated region
    $region10: #{tpu_custom_call.1} parent=1 // pred_check
      _
    $region11: #{tpu_custom_call.1} parent=1 // pred_check_branch
      %20 = sbr.rel (0) target = $region13
    $region12: #{tpu_custom_call.1} parent=1 // pred_region
      _
    $region13: #{tpu_custom_call.1} parent=1 // pred_fallthru
      _
    // Predicated region
    $region14: #{tpu_custom_call.1} parent=1 // pred_check
      _
    $region15: #{tpu_custom_call.1} parent=1 // pred_check_branch
      %22 = sbr.rel (0) target = $region17
    $region16: #{tpu_custom_call.1} parent=1 // pred_region
      _
    $region17: #{tpu_custom_call.1} parent=1 // pred_fallthru
      _
    // Predicated region
    $region18: #{tpu_custom_call.1} parent=1 // pred_check
      _
    $region19: #{tpu_custom_call.1} parent=1 // pred_check_branch
      %24 = sbr.rel (0) target = $region21
    $region20: #{tpu_custom_call.1} parent=1 // pred_region
      _
    $region21: #{tpu_custom_call.1} parent=1 // pred_fallthru
      _
    // Predicated region
    $region22: #{tpu_custom_call.1} parent=1 // pred_check
      _
    $region23: #{tpu_custom_call.1} parent=1 // pred_check_branch
      %26 = sbr.rel (0) target = $region25
    $region24: #{tpu_custom_call.1} parent=1 // pred_region
      _
    $region25: #{tpu_custom_call.1} parent=1 // pred_fallthru
      _
    // Predicated region
    $region26: #{tpu_custom_call.1} parent=1 // pred_check
      _
    $region27: #{tpu_custom_call.1} parent=1 // pred_check_branch
      %28 = sbr.rel (0) target = $region29
    $region28: #{tpu_custom_call.1} parent=1 // pred_region
      _
    $region29: #{tpu_custom_call.1} parent=1 // pred_fallthru
      _
    %v29 = vld [vmem:[%s0] sm:$0xf]
    %v30 = vld [vmem:[%s1] sm:$0xff]
    %v31 = vld [vmem:[%s1 + $0x8] sm:$0xff]
    %v32 = vld [vmem:[%s1 + $0x10] sm:$0xff]
    %v33 = vld [vmem:[%s1 + $0x18] sm:$0xff]
    %v34 = vld [vmem:[%s1 + $0x20] sm:$0xff]
    %v35 = vld [vmem:[%s1 + $0x28] sm:$0xff]
    %v36 = vld [vmem:[%s1 + $0x30] sm:$0xff]
    %v37 = vld [vmem:[%s1 + $0x38] sm:$0xff]
    %v38 = vld [vmem:[%s1 + $0x40] sm:$0xff]
    %v39 = vld [vmem:[%s1 + $0x48] sm:$0xff]
    %v40 = vld [vmem:[%s1 + $0x50] sm:$0xff]
    %v41 = vld [vmem:[%s1 + $0x58] sm:$0xff]
    %v42 = vld [vmem:[%s1 + $0x60] sm:$0xff]
    %v43 = vld [vmem:[%s1 + $0x68] sm:$0xff]
    %v44 = vld [vmem:[%s1 + $0x70] sm:$0xff]
    %v45 = vld [vmem:[%s1 + $0x78] sm:$0xff]
    %47 = vset.pattern.permute.xlu0 0
    %48 = vperm.xlu0 %47, %v30
    %v49 = vpop.permute.xlu0 %48
    %52 = vset.pattern.permute.xlu0 0
    %53 = vperm.xlu0 %52, %v31
    %v54 = vpop.permute.xlu0 %53
    %57 = vset.pattern.permute.xlu0 0
    %58 = vperm.xlu0 %57, %v32
    %v59 = vpop.permute.xlu0 %58
    %62 = vset.pattern.permute.xlu0 0
    %63 = vperm.xlu0 %62, %v33
    %v64 = vpop.permute.xlu0 %63
    %67 = vset.pattern.permute.xlu0 0
    %68 = vperm.xlu0 %67, %v34
    %v69 = vpop.permute.xlu0 %68
    %72 = vset.pattern.permute.xlu0 0
    %73 = vperm.xlu0 %72, %v35
    %v74 = vpop.permute.xlu0 %73
    %77 = vset.pattern.permute.xlu0 0
    %78 = vperm.xlu0 %77, %v36
    %v79 = vpop.permute.xlu0 %78
    %82 = vset.pattern.permute.xlu0 0
    %83 = vperm.xlu0 %82, %v37
    %v84 = vpop.permute.xlu0 %83
    %87 = vset.pattern.permute.xlu0 0
    %88 = vperm.xlu0 %87, %v38
    %v89 = vpop.permute.xlu0 %88
    %92 = vset.pattern.permute.xlu0 0
    %93 = vperm.xlu0 %92, %v39
    %v94 = vpop.permute.xlu0 %93
    %97 = vset.pattern.permute.xlu0 0
    %98 = vperm.xlu0 %97, %v40
    %v99 = vpop.permute.xlu0 %98
    %102 = vset.pattern.permute.xlu0 0
    %103 = vperm.xlu0 %102, %v41
    %v104 = vpop.permute.xlu0 %103
    %107 = vset.pattern.permute.xlu0 0
    %108 = vperm.xlu0 %107, %v42
    %v109 = vpop.permute.xlu0 %108
    %112 = vset.pattern.permute.xlu0 0
    %113 = vperm.xlu0 %112, %v43
    %v114 = vpop.permute.xlu0 %113
    %117 = vset.pattern.permute.xlu0 0
    %118 = vperm.xlu0 %117, %v44
    %v119 = vpop.permute.xlu0 %118
    %122 = vset.pattern.permute.xlu0 0
    %123 = vperm.xlu0 %122, %v45
    %v124 = vpop.permute.xlu0 %123
    %v127 = vlaneseq
    %v128 = vshrl.u32 %v127, 7
    %v129 = vsub.s32 0, %v128
    %v130 = vrot.slane %v29, %v129
    %v131 = vlaneseq
    %v132 = vshrl.u32 %v131, 7
    %v133 = vsub.s32 1, %v132
    %v134 = vrot.slane %v29, %v133
    %v135 = vlaneseq
    %v136 = vshrl.u32 %v135, 7
    %v137 = vsub.s32 2, %v136
    %v138 = vrot.slane %v29, %v137
    %v139 = vlaneseq
    %v140 = vshrl.u32 %v139, 7
    %v141 = vsub.s32 3, %v140
    %v142 = vrot.slane %v29, %v141
    %v147 = vmul.f32 %v49, %v130
    %v148 = vmul.f32 %v49, %v134
    %v149 = vmul.f32 %v49, %v138
    %v150 = vmul.f32 %v49, %v142
    %v151 = vmul.f32 %v54, %v130
    %v152 = vmul.f32 %v54, %v134
    %v153 = vmul.f32 %v54, %v138
    %v154 = vmul.f32 %v54, %v142
    %v155 = vmul.f32 %v59, %v130
    %v156 = vmul.f32 %v59, %v134
    %v157 = vmul.f32 %v59, %v138
    %v158 = vmul.f32 %v59, %v142
    %v159 = vmul.f32 %v64, %v130
    %v160 = vmul.f32 %v64, %v134
    %v161 = vmul.f32 %v64, %v138
    %v162 = vmul.f32 %v64, %v142
    %v163 = vmul.f32 %v69, %v130
    %v164 = vmul.f32 %v69, %v134
    %v165 = vmul.f32 %v69, %v138
    %v166 = vmul.f32 %v69, %v142
    %v167 = vmul.f32 %v74, %v130
    %v168 = vmul.f32 %v74, %v134
    %v169 = vmul.f32 %v74, %v138
    %v170 = vmul.f32 %v74, %v142
    %v171 = vmul.f32 %v79, %v130
    %v172 = vmul.f32 %v79, %v134
    %v173 = vmul.f32 %v79, %v138
    %v174 = vmul.f32 %v79, %v142
    %v175 = vmul.f32 %v84, %v130
    %v176 = vmul.f32 %v84, %v134
    %v177 = vmul.f32 %v84, %v138
    %v178 = vmul.f32 %v84, %v142
    %v179 = vmul.f32 %v89, %v130
    %v180 = vmul.f32 %v89, %v134
    %v181 = vmul.f32 %v89, %v138
    %v182 = vmul.f32 %v89, %v142
    %v183 = vmul.f32 %v94, %v130
    %v184 = vmul.f32 %v94, %v134
    %v185 = vmul.f32 %v94, %v138
    %v186 = vmul.f32 %v94, %v142
    %v187 = vmul.f32 %v99, %v130
    %v188 = vmul.f32 %v99, %v134
    %v189 = vmul.f32 %v99, %v138
    %v190 = vmul.f32 %v99, %v142
    %v191 = vmul.f32 %v104, %v130
    %v192 = vmul.f32 %v104, %v134
    %v193 = vmul.f32 %v104, %v138
    %v194 = vmul.f32 %v104, %v142
    %v195 = vmul.f32 %v109, %v130
    %v196 = vmul.f32 %v109, %v134
    %v197 = vmul.f32 %v109, %v138
    %v198 = vmul.f32 %v109, %v142
    %v199 = vmul.f32 %v114, %v130
    %v200 = vmul.f32 %v114, %v134
    %v201 = vmul.f32 %v114, %v138
    %v202 = vmul.f32 %v114, %v142
    %v203 = vmul.f32 %v119, %v130
    %v204 = vmul.f32 %v119, %v134
    %v205 = vmul.f32 %v119, %v138
    %v206 = vmul.f32 %v119, %v142
    %v207 = vmul.f32 %v124, %v130
    %v208 = vmul.f32 %v124, %v134
    %v209 = vmul.f32 %v124, %v138
    %v210 = vmul.f32 %v124, %v142
    %v211 = vld [vmem:[%s2] sm:$0xff]
    %v212 = vld [vmem:[%s2 + $0x8] sm:$0xff]
    %v213 = vld [vmem:[%s2 + $0x10] sm:$0xff]
    %v214 = vld [vmem:[%s2 + $0x18] sm:$0xff]
    %v215 = vld [vmem:[%s2 + $0x20] sm:$0xff]
    %v216 = vld [vmem:[%s2 + $0x28] sm:$0xff]
    %v217 = vld [vmem:[%s2 + $0x30] sm:$0xff]
    %v218 = vld [vmem:[%s2 + $0x38] sm:$0xff]
    %v219 = vld [vmem:[%s2 + $0x40] sm:$0xff]
    %v220 = vld [vmem:[%s2 + $0x48] sm:$0xff]
    %v221 = vld [vmem:[%s2 + $0x50] sm:$0xff]
    %v222 = vld [vmem:[%s2 + $0x58] sm:$0xff]
    %v223 = vld [vmem:[%s2 + $0x60] sm:$0xff]
    %v224 = vld [vmem:[%s2 + $0x68] sm:$0xff]
    %v225 = vld [vmem:[%s2 + $0x70] sm:$0xff]
    %v226 = vld [vmem:[%s2 + $0x78] sm:$0xff]
    %228 = vset.pattern.permute.xlu0 0
    %229 = vperm.xlu0 %228, %v211
    %v230 = vpop.permute.xlu0 %229
    %233 = vset.pattern.permute.xlu0 0
    %234 = vperm.xlu0 %233, %v212
    %v235 = vpop.permute.xlu0 %234
    %238 = vset.pattern.permute.xlu0 0
    %239 = vperm.xlu0 %238, %v213
    %v240 = vpop.permute.xlu0 %239
    %243 = vset.pattern.permute.xlu0 0
    %244 = vperm.xlu0 %243, %v214
    %v245 = vpop.permute.xlu0 %244
    %248 = vset.pattern.permute.xlu0 0
    %249 = vperm.xlu0 %248, %v215
    %v250 = vpop.permute.xlu0 %249
    %253 = vset.pattern.permute.xlu0 0
    %254 = vperm.xlu0 %253, %v216
    %v255 = vpop.permute.xlu0 %254
    %258 = vset.pattern.permute.xlu0 0
    %259 = vperm.xlu0 %258, %v217
    %v260 = vpop.permute.xlu0 %259
    %263 = vset.pattern.permute.xlu0 0
    %264 = vperm.xlu0 %263, %v218
    %v265 = vpop.permute.xlu0 %264
    %268 = vset.pattern.permute.xlu0 0
    %269 = vperm.xlu0 %268, %v219
    %v270 = vpop.permute.xlu0 %269
    %273 = vset.pattern.permute.xlu0 0
    %274 = vperm.xlu0 %273, %v220
    %v275 = vpop.permute.xlu0 %274
    %278 = vset.pattern.permute.xlu0 0
    %279 = vperm.xlu0 %278, %v221
    %v280 = vpop.permute.xlu0 %279
    %283 = vset.pattern.permute.xlu0 0
    %284 = vperm.xlu0 %283, %v222
    %v285 = vpop.permute.xlu0 %284
    %288 = vset.pattern.permute.xlu0 0
    %289 = vperm.xlu0 %288, %v223
    %v290 = vpop.permute.xlu0 %289
    %293 = vset.pattern.permute.xlu0 0
    %294 = vperm.xlu0 %293, %v224
    %v295 = vpop.permute.xlu0 %294
    %298 = vset.pattern.permute.xlu0 0
    %299 = vperm.xlu0 %298, %v225
    %v300 = vpop.permute.xlu0 %299
    %303 = vset.pattern.permute.xlu0 0
    %304 = vperm.xlu0 %303, %v226
    %v305 = vpop.permute.xlu0 %304
    %v307 = vadd.f32 %v147, %v230
    %v308 = vadd.f32 %v148, %v230
    %v309 = vadd.f32 %v149, %v230
    %v310 = vadd.f32 %v150, %v230
    %v311 = vadd.f32 %v151, %v235
    %v312 = vadd.f32 %v152, %v235
    %v313 = vadd.f32 %v153, %v235
    %v314 = vadd.f32 %v154, %v235
    %v315 = vadd.f32 %v155, %v240
    %v316 = vadd.f32 %v156, %v240
    %v317 = vadd.f32 %v157, %v240
    %v318 = vadd.f32 %v158, %v240
    %v319 = vadd.f32 %v159, %v245
    %v320 = vadd.f32 %v160, %v245
    %v321 = vadd.f32 %v161, %v245
    %v322 = vadd.f32 %v162, %v245
    %v323 = vadd.f32 %v163, %v250
    %v324 = vadd.f32 %v164, %v250
    %v325 = vadd.f32 %v165, %v250
    %v326 = vadd.f32 %v166, %v250
    %v327 = vadd.f32 %v167, %v255
    %v328 = vadd.f32 %v168, %v255
    %v329 = vadd.f32 %v169, %v255
    %v330 = vadd.f32 %v170, %v255
    %v331 = vadd.f32 %v171, %v260
    %v332 = vadd.f32 %v172, %v260
    %v333 = vadd.f32 %v173, %v260
    %v334 = vadd.f32 %v174, %v260
    %v335 = vadd.f32 %v175, %v265
    %v336 = vadd.f32 %v176, %v265
    %v337 = vadd.f32 %v177, %v265
    %v338 = vadd.f32 %v178, %v265
    %v339 = vadd.f32 %v179, %v270
    %v340 = vadd.f32 %v180, %v270
    %v341 = vadd.f32 %v181, %v270
    %v342 = vadd.f32 %v182, %v270
    %v343 = vadd.f32 %v183, %v275
    %v344 = vadd.f32 %v184, %v275
    %v345 = vadd.f32 %v185, %v275
    %v346 = vadd.f32 %v186, %v275
    %v347 = vadd.f32 %v187, %v280
    %v348 = vadd.f32 %v188, %v280
    %v349 = vadd.f32 %v189, %v280
    %v350 = vadd.f32 %v190, %v280
    %v351 = vadd.f32 %v191, %v285
    %v352 = vadd.f32 %v192, %v285
    %v353 = vadd.f32 %v193, %v285
    %v354 = vadd.f32 %v194, %v285
    %v355 = vadd.f32 %v195, %v290
    %v356 = vadd.f32 %v196, %v290
    %v357 = vadd.f32 %v197, %v290
    %v358 = vadd.f32 %v198, %v290
    %v359 = vadd.f32 %v199, %v295
    %v360 = vadd.f32 %v200, %v295
    %v361 = vadd.f32 %v201, %v295
    %v362 = vadd.f32 %v202, %v295
    %v363 = vadd.f32 %v203, %v300
    %v364 = vadd.f32 %v204, %v300
    %v365 = vadd.f32 %v205, %v300
    %v366 = vadd.f32 %v206, %v300
    %v367 = vadd.f32 %v207, %v305
    %v368 = vadd.f32 %v208, %v305
    %v369 = vadd.f32 %v209, %v305
    %v370 = vadd.f32 %v210, %v305
    %v371 = vmax.f32 %v307, 0.0
    %v372 = vmax.f32 %v308, 0.0
    %v373 = vmax.f32 %v309, 0.0
    %v374 = vmax.f32 %v310, 0.0
    %v375 = vmax.f32 %v311, 0.0
    %v376 = vmax.f32 %v312, 0.0
    %v377 = vmax.f32 %v313, 0.0
    %v378 = vmax.f32 %v314, 0.0
    %v379 = vmax.f32 %v315, 0.0
    %v380 = vmax.f32 %v316, 0.0
    %v381 = vmax.f32 %v317, 0.0
    %v382 = vmax.f32 %v318, 0.0
    %v383 = vmax.f32 %v319, 0.0
    %v384 = vmax.f32 %v320, 0.0
    %v385 = vmax.f32 %v321, 0.0
    %v386 = vmax.f32 %v322, 0.0
    %v387 = vmax.f32 %v323, 0.0
    %v388 = vmax.f32 %v324, 0.0
    %v389 = vmax.f32 %v325, 0.0
    %v390 = vmax.f32 %v326, 0.0
    %v391 = vmax.f32 %v327, 0.0
    %v392 = vmax.f32 %v328, 0.0
    %v393 = vmax.f32 %v329, 0.0
    %v394 = vmax.f32 %v330, 0.0
    %v395 = vmax.f32 %v331, 0.0
    %v396 = vmax.f32 %v332, 0.0
    %v397 = vmax.f32 %v333, 0.0
    %v398 = vmax.f32 %v334, 0.0
    %v399 = vmax.f32 %v335, 0.0
    %v400 = vmax.f32 %v336, 0.0
    %v401 = vmax.f32 %v337, 0.0
    %v402 = vmax.f32 %v338, 0.0
    %v403 = vmax.f32 %v339, 0.0
    %v404 = vmax.f32 %v340, 0.0
    %v405 = vmax.f32 %v341, 0.0
    %v406 = vmax.f32 %v342, 0.0
    %v407 = vmax.f32 %v343, 0.0
    %v408 = vmax.f32 %v344, 0.0
    %v409 = vmax.f32 %v345, 0.0
    %v410 = vmax.f32 %v346, 0.0
    %v411 = vmax.f32 %v347, 0.0
    %v412 = vmax.f32 %v348, 0.0
    %v413 = vmax.f32 %v349, 0.0
    %v414 = vmax.f32 %v350, 0.0
    %v415 = vmax.f32 %v351, 0.0
    %v416 = vmax.f32 %v352, 0.0
    %v417 = vmax.f32 %v353, 0.0
    %v418 = vmax.f32 %v354, 0.0
    %v419 = vmax.f32 %v355, 0.0
    %v420 = vmax.f32 %v356, 0.0
    %v421 = vmax.f32 %v357, 0.0
    %v422 = vmax.f32 %v358, 0.0
    %v423 = vmax.f32 %v359, 0.0
    %v424 = vmax.f32 %v360, 0.0
    %v425 = vmax.f32 %v361, 0.0
    %v426 = vmax.f32 %v362, 0.0
    %v427 = vmax.f32 %v363, 0.0
    %v428 = vmax.f32 %v364, 0.0
    %v429 = vmax.f32 %v365, 0.0
    %v430 = vmax.f32 %v366, 0.0
    %v431 = vmax.f32 %v367, 0.0
    %v432 = vmax.f32 %v368, 0.0
    %v433 = vmax.f32 %v369, 0.0
    %v434 = vmax.f32 %v370, 0.0
    %v435 = vld [vmem:[%s3] sm:$0xff]
    %v436 = vld [vmem:[%s3 + $0x8] sm:$0xff]
    %v437 = vld [vmem:[%s3 + $0x10] sm:$0xff]
    %v438 = vld [vmem:[%s3 + $0x18] sm:$0xff]
    %v439 = vld [vmem:[%s3 + $0x20] sm:$0xff]
    %v440 = vld [vmem:[%s3 + $0x28] sm:$0xff]
    %v441 = vld [vmem:[%s3 + $0x30] sm:$0xff]
    %v442 = vld [vmem:[%s3 + $0x38] sm:$0xff]
    %v443 = vld [vmem:[%s3 + $0x40] sm:$0xff]
    %v444 = vld [vmem:[%s3 + $0x48] sm:$0xff]
    %v445 = vld [vmem:[%s3 + $0x50] sm:$0xff]
    %v446 = vld [vmem:[%s3 + $0x58] sm:$0xff]
    %v447 = vld [vmem:[%s3 + $0x60] sm:$0xff]
    %v448 = vld [vmem:[%s3 + $0x68] sm:$0xff]
    %v449 = vld [vmem:[%s3 + $0x70] sm:$0xff]
    %v450 = vld [vmem:[%s3 + $0x78] sm:$0xff]
    %v451 = vld [vmem:[%s4] sm:$0xff]
    %v452 = vld [vmem:[%s4 + $0x8] sm:$0xff]
    %v453 = vld [vmem:[%s4 + $0x10] sm:$0xff]
    %v454 = vld [vmem:[%s4 + $0x18] sm:$0xff]
    %v455 = vld [vmem:[%s4 + $0x20] sm:$0xff]
    %v456 = vld [vmem:[%s4 + $0x28] sm:$0xff]
    %v457 = vld [vmem:[%s4 + $0x30] sm:$0xff]
    %v458 = vld [vmem:[%s4 + $0x38] sm:$0xff]
    %v459 = vld [vmem:[%s4 + $0x40] sm:$0xff]
    %v460 = vld [vmem:[%s4 + $0x48] sm:$0xff]
    %v461 = vld [vmem:[%s4 + $0x50] sm:$0xff]
    %v462 = vld [vmem:[%s4 + $0x58] sm:$0xff]
    %v463 = vld [vmem:[%s4 + $0x60] sm:$0xff]
    %v464 = vld [vmem:[%s4 + $0x68] sm:$0xff]
    %v465 = vld [vmem:[%s4 + $0x70] sm:$0xff]
    %v466 = vld [vmem:[%s4 + $0x78] sm:$0xff]
    %468 = vset.pattern.permute.xlu0 0
    %469 = vperm.xlu0 %468, %v451
    %v470 = vpop.permute.xlu0 %469
    %473 = vset.pattern.permute.xlu0 0
    %474 = vperm.xlu0 %473, %v452
    %v475 = vpop.permute.xlu0 %474
    %478 = vset.pattern.permute.xlu0 0
    %479 = vperm.xlu0 %478, %v453
    %v480 = vpop.permute.xlu0 %479
    %483 = vset.pattern.permute.xlu0 0
    %484 = vperm.xlu0 %483, %v454
    %v485 = vpop.permute.xlu0 %484
    %488 = vset.pattern.permute.xlu0 0
    %489 = vperm.xlu0 %488, %v455
    %v490 = vpop.permute.xlu0 %489
    %493 = vset.pattern.permute.xlu0 0
    %494 = vperm.xlu0 %493, %v456
    %v495 = vpop.permute.xlu0 %494
    %498 = vset.pattern.permute.xlu0 0
    %499 = vperm.xlu0 %498, %v457
    %v500 = vpop.permute.xlu0 %499
    %503 = vset.pattern.permute.xlu0 0
    %504 = vperm.xlu0 %503, %v458
    %v505 = vpop.permute.xlu0 %504
    %508 = vset.pattern.permute.xlu0 0
    %509 = vperm.xlu0 %508, %v459
    %v510 = vpop.permute.xlu0 %509
    %513 = vset.pattern.permute.xlu0 0
    %514 = vperm.xlu0 %513, %v460
    %v515 = vpop.permute.xlu0 %514
    %518 = vset.pattern.permute.xlu0 0
    %519 = vperm.xlu0 %518, %v461
    %v520 = vpop.permute.xlu0 %519
    %523 = vset.pattern.permute.xlu0 0
    %524 = vperm.xlu0 %523, %v462
    %v525 = vpop.permute.xlu0 %524
    %528 = vset.pattern.permute.xlu0 0
    %529 = vperm.xlu0 %528, %v463
    %v530 = vpop.permute.xlu0 %529
    %533 = vset.pattern.permute.xlu0 0
    %534 = vperm.xlu0 %533, %v464
    %v535 = vpop.permute.xlu0 %534
    %538 = vset.pattern.permute.xlu0 0
    %539 = vperm.xlu0 %538, %v465
    %v540 = vpop.permute.xlu0 %539
    %543 = vset.pattern.permute.xlu0 0
    %544 = vperm.xlu0 %543, %v466
    %v545 = vpop.permute.xlu0 %544
    %547 = vmatprep.subr.mxu0 %v432
    %548 = vmatpush1.msra.mxu0 %v431
    %549 = vmatprep.subr.mxu0 %v428
    %550 = vmatpush1.msra.mxu0 %v427
    %551 = vmatprep.subr.mxu0 %v424
    %552 = vmatpush1.msra.mxu0 %v423
    %553 = vmatprep.subr.mxu0 %v420
    %554 = vmatpush1.msra.mxu0 %v419
    %555 = vmatprep.subr.mxu0 %v416
    %556 = vmatpush1.msra.mxu0 %v415
    %557 = vmatprep.subr.mxu0 %v412
    %558 = vmatpush1.msra.mxu0 %v411
    %559 = vmatprep.subr.mxu0 %v408
    %560 = vmatpush1.msra.mxu0 %v407
    %561 = vmatprep.subr.mxu0 %v404
    %562 = vmatpush1.msra.mxu0 %v403
    %563 = vmatprep.subr.mxu0 %v400
    %564 = vmatpush1.msra.mxu0 %v399
    %565 = vmatprep.subr.mxu0 %v396
    %566 = vmatpush1.msra.mxu0 %v395
    %567 = vmatprep.subr.mxu0 %v392
    %568 = vmatpush1.msra.mxu0 %v391
    %569 = vmatprep.subr.mxu0 %v388
    %570 = vmatpush1.msra.mxu0 %v387
    %571 = vmatprep.subr.mxu0 %v384
    %572 = vmatpush1.msra.mxu0 %v383
    %573 = vmatprep.subr.mxu0 %v380
    %574 = vmatpush1.msra.mxu0 %v379
    %575 = vmatprep.subr.mxu0 %v376
    %576 = vmatpush1.msra.mxu0 %v375
    %577 = vmatprep.subr.mxu0 %v372
    %578 = vmatpush1.msra.mxu0 %v371
    %579 = vmatprep.subr.mxu0 0.0
    %580 = vmatpush2.msra.mxu0 0.0
    %581 = vmatprep.subr.mxu0 0.0
    %582 = vmatpush2.msra.mxu0 0.0
    %583 = vmatprep.subr.mxu0 0.0
    %584 = vmatpush2.msra.mxu0 0.0
    %585 = vmatprep.subr.mxu0 0.0
    %586 = vmatpush2.msra.mxu0 0.0
    %587 = vmatprep.subr.mxu0 0.0
    %588 = vmatpush2.msra.mxu0 0.0
    %589 = vmatprep.subr.mxu0 0.0
    %590 = vmatpush2.msra.mxu0 0.0
    %591 = vmatprep.subr.mxu0 0.0
    %592 = vmatpush2.msra.mxu0 0.0
    %593 = vmatprep.subr.mxu0 0.0
    %594 = vmatpush2.msra.mxu0 0.0
    %595 = vmatprep.subr.mxu0 0.0
    %596 = vmatpush2.msra.mxu0 0.0
    %597 = vmatprep.subr.mxu0 0.0
    %598 = vmatpush2.msra.mxu0 0.0
    %599 = vmatprep.subr.mxu0 0.0
    %600 = vmatpush2.msra.mxu0 0.0
    %601 = vmatprep.subr.mxu0 0.0
    %602 = vmatpush2.msra.mxu0 0.0
    %603 = vmatprep.subr.mxu0 0.0
    %604 = vmatpush2.msra.mxu0 0.0
    %605 = vmatprep.subr.mxu0 0.0
    %606 = vmatpush2.msra.mxu0 0.0
    %607 = vmatprep.subr.mxu0 0.0
    %608 = vmatpush2.msra.mxu0 0.0
    %609 = vmatprep.subr.mxu0 0.0
    %610 = vmatpush2.msra.mxu0 0.0
    %611 = vmatprep.mubr.f32.mxu0 0.0
    %612 = vmatmul.mubr.f32.gmra.mxu0 %v435
    %v613 = vpop.f32.mrf.mxu0
    %v614 = vadd.f32 %v470, %v613
    %v615 = vpop.f32.mrf.mxu0
    %v616 = vadd.f32 %v470, %v615
    %617 = vmatprep.mubr.f32.mxu0 0.0
    %618 = vmatmul.mubr.f32.gmra.mxu0 %v436
    %v619 = vpop.f32.mrf.mxu0
    %v620 = vadd.f32 %v475, %v619
    %v621 = vpop.f32.mrf.mxu0
    %v622 = vadd.f32 %v475, %v621
    %623 = vmatprep.mubr.f32.mxu0 0.0
    %624 = vmatmul.mubr.f32.gmra.mxu0 %v437
    %v625 = vpop.f32.mrf.mxu0
    %v626 = vadd.f32 %v480, %v625
    %v627 = vpop.f32.mrf.mxu0
    %v628 = vadd.f32 %v480, %v627
    %629 = vmatprep.mubr.f32.mxu0 0.0
    %630 = vmatmul.mubr.f32.gmra.mxu0 %v438
    %v631 = vpop.f32.mrf.mxu0
    %v632 = vadd.f32 %v485, %v631
    %v633 = vpop.f32.mrf.mxu0
    %v634 = vadd.f32 %v485, %v633
    %635 = vmatprep.mubr.f32.mxu0 0.0
    %636 = vmatmul.mubr.f32.gmra.mxu0 %v439
    %v637 = vpop.f32.mrf.mxu0
    %v638 = vadd.f32 %v490, %v637
    %v639 = vpop.f32.mrf.mxu0
    %v640 = vadd.f32 %v490, %v639
    %641 = vmatprep.mubr.f32.mxu0 0.0
    %642 = vmatmul.mubr.f32.gmra.mxu0 %v440
    %v643 = vpop.f32.mrf.mxu0
    %v644 = vadd.f32 %v495, %v643
    %v645 = vpop.f32.mrf.mxu0
    %v646 = vadd.f32 %v495, %v645
    %647 = vmatprep.mubr.f32.mxu0 0.0
    %648 = vmatmul.mubr.f32.gmra.mxu0 %v441
    %v649 = vpop.f32.mrf.mxu0
    %v650 = vadd.f32 %v500, %v649
    %v651 = vpop.f32.mrf.mxu0
    %v652 = vadd.f32 %v500, %v651
    %653 = vmatprep.mubr.f32.mxu0 0.0
    %654 = vmatmul.mubr.f32.gmra.mxu0 %v442
    %v655 = vpop.f32.mrf.mxu0
    %v656 = vadd.f32 %v505, %v655
    %v657 = vpop.f32.mrf.mxu0
    %v658 = vadd.f32 %v505, %v657
    %659 = vmatprep.mubr.f32.mxu0 0.0
    %660 = vmatmul.mubr.f32.gmra.mxu0 %v443
    %v661 = vpop.f32.mrf.mxu0
    %v662 = vadd.f32 %v510, %v661
    %v663 = vpop.f32.mrf.mxu0
    %v664 = vadd.f32 %v510, %v663
    %665 = vmatprep.mubr.f32.mxu0 0.0
    %666 = vmatmul.mubr.f32.gmra.mxu0 %v444
    %v667 = vpop.f32.mrf.mxu0
    %v668 = vadd.f32 %v515, %v667
    %v669 = vpop.f32.mrf.mxu0
    %v670 = vadd.f32 %v515, %v669
    %671 = vmatprep.mubr.f32.mxu0 0.0
    %672 = vmatmul.mubr.f32.gmra.mxu0 %v445
    %v673 = vpop.f32.mrf.mxu0
    %v674 = vadd.f32 %v520, %v673
    %v675 = vpop.f32.mrf.mxu0
    %v676 = vadd.f32 %v520, %v675
    %677 = vmatprep.mubr.f32.mxu0 0.0
    %678 = vmatmul.mubr.f32.gmra.mxu0 %v446
    %v679 = vpop.f32.mrf.mxu0
    %v680 = vadd.f32 %v525, %v679
    %v681 = vpop.f32.mrf.mxu0
    %v682 = vadd.f32 %v525, %v681
    %683 = vmatprep.mubr.f32.mxu0 0.0
    %684 = vmatmul.mubr.f32.gmra.mxu0 %v447
    %v685 = vpop.f32.mrf.mxu0
    %v686 = vadd.f32 %v530, %v685
    %v687 = vpop.f32.mrf.mxu0
    %v688 = vadd.f32 %v530, %v687
    %689 = vmatprep.mubr.f32.mxu0 0.0
    %690 = vmatmul.mubr.f32.gmra.mxu0 %v448
    %v691 = vpop.f32.mrf.mxu0
    %v692 = vadd.f32 %v535, %v691
    %v693 = vpop.f32.mrf.mxu0
    %v694 = vadd.f32 %v535, %v693
    %695 = vmatprep.mubr.f32.mxu0 0.0
    %696 = vmatmul.mubr.f32.gmra.mxu0 %v449
    %v697 = vpop.f32.mrf.mxu0
    %v698 = vadd.f32 %v540, %v697
    %v699 = vpop.f32.mrf.mxu0
    %v700 = vadd.f32 %v540, %v699
    %701 = vmatprep.mubr.f32.mxu0 0.0
    %702 = vmatmul.mubr.f32.gmra.mxu0 %v450
    %v703 = vpop.f32.mrf.mxu0
    %v704 = vadd.f32 %v545, %v703
    %v705 = vpop.f32.mrf.mxu0
    %v706 = vadd.f32 %v545, %v705
    %707 = vdwg.mxu0
    %708 = vmatprep.subr.mxu0 %v434
    %709 = vmatpush1.msra.mxu0 %v433
    %710 = vmatprep.subr.mxu0 %v430
    %711 = vmatpush1.msra.mxu0 %v429
    %712 = vmatprep.subr.mxu0 %v426
    %713 = vmatpush1.msra.mxu0 %v425
    %714 = vmatprep.subr.mxu0 %v422
    %715 = vmatpush1.msra.mxu0 %v421
    %716 = vmatprep.subr.mxu0 %v418
    %717 = vmatpush1.msra.mxu0 %v417
    %718 = vmatprep.subr.mxu0 %v414
    %719 = vmatpush1.msra.mxu0 %v413
    %720 = vmatprep.subr.mxu0 %v410
    %721 = vmatpush1.msra.mxu0 %v409
    %722 = vmatprep.subr.mxu0 %v406
    %723 = vmatpush1.msra.mxu0 %v405
    %724 = vmatprep.subr.mxu0 %v402
    %725 = vmatpush1.msra.mxu0 %v401
    %726 = vmatprep.subr.mxu0 %v398
    %727 = vmatpush1.msra.mxu0 %v397
    %728 = vmatprep.subr.mxu0 %v394
    %729 = vmatpush1.msra.mxu0 %v393
    %730 = vmatprep.subr.mxu0 %v390
    %731 = vmatpush1.msra.mxu0 %v389
    %732 = vmatprep.subr.mxu0 %v386
    %733 = vmatpush1.msra.mxu0 %v385
    %734 = vmatprep.subr.mxu0 %v382
    %735 = vmatpush1.msra.mxu0 %v381
    %736 = vmatprep.subr.mxu0 %v378
    %737 = vmatpush1.msra.mxu0 %v377
    %738 = vmatprep.subr.mxu0 %v374
    %739 = vmatpush1.msra.mxu0 %v373
    %740 = vmatprep.subr.mxu0 0.0
    %741 = vmatpush2.msra.mxu0 0.0
    %742 = vmatprep.subr.mxu0 0.0
    %743 = vmatpush2.msra.mxu0 0.0
    %744 = vmatprep.subr.mxu0 0.0
    %745 = vmatpush2.msra.mxu0 0.0
    %746 = vmatprep.subr.mxu0 0.0
    %747 = vmatpush2.msra.mxu0 0.0
    %748 = vmatprep.subr.mxu0 0.0
    %749 = vmatpush2.msra.mxu0 0.0
    %750 = vmatprep.subr.mxu0 0.0
    %751 = vmatpush2.msra.mxu0 0.0
    %752 = vmatprep.subr.mxu0 0.0
    %753 = vmatpush2.msra.mxu0 0.0
    %754 = vmatprep.subr.mxu0 0.0
    %755 = vmatpush2.msra.mxu0 0.0
    %756 = vmatprep.subr.mxu0 0.0
    %757 = vmatpush2.msra.mxu0 0.0
    %758 = vmatprep.subr.mxu0 0.0
    %759 = vmatpush2.msra.mxu0 0.0
    %760 = vmatprep.subr.mxu0 0.0
    %761 = vmatpush2.msra.mxu0 0.0
    %762 = vmatprep.subr.mxu0 0.0
    %763 = vmatpush2.msra.mxu0 0.0
    %764 = vmatprep.subr.mxu0 0.0
    %765 = vmatpush2.msra.mxu0 0.0
    %766 = vmatprep.subr.mxu0 0.0
    %767 = vmatpush2.msra.mxu0 0.0
    %768 = vmatprep.subr.mxu0 0.0
    %769 = vmatpush2.msra.mxu0 0.0
    %770 = vmatprep.subr.mxu0 0.0
    %771 = vmatpush2.msra.mxu0 0.0
    %772 = vmatprep.mubr.f32.mxu0 0.0
    %773 = vmatmul.mubr.f32.gmra.mxu0 %v435
    %v774 = vpop.f32.mrf.mxu0
    %v775 = vadd.f32 %v470, %v774
    %v776 = vpop.f32.mrf.mxu0
    %v777 = vadd.f32 %v470, %v776
    %778 = vmatprep.mubr.f32.mxu0 0.0
    %779 = vmatmul.mubr.f32.gmra.mxu0 %v436
    %v780 = vpop.f32.mrf.mxu0
    %v781 = vadd.f32 %v475, %v780
    %v782 = vpop.f32.mrf.mxu0
    %v783 = vadd.f32 %v475, %v782
    %784 = vmatprep.mubr.f32.mxu0 0.0
    %785 = vmatmul.mubr.f32.gmra.mxu0 %v437
    %v786 = vpop.f32.mrf.mxu0
    %v787 = vadd.f32 %v480, %v786
    %v788 = vpop.f32.mrf.mxu0
    %v789 = vadd.f32 %v480, %v788
    %790 = vmatprep.mubr.f32.mxu0 0.0
    %791 = vmatmul.mubr.f32.gmra.mxu0 %v438
    %v792 = vpop.f32.mrf.mxu0
    %v793 = vadd.f32 %v485, %v792
    %v794 = vpop.f32.mrf.mxu0
    %v795 = vadd.f32 %v485, %v794
    %796 = vmatprep.mubr.f32.mxu0 0.0
    %797 = vmatmul.mubr.f32.gmra.mxu0 %v439
    %v798 = vpop.f32.mrf.mxu0
    %v799 = vadd.f32 %v490, %v798
    %v800 = vpop.f32.mrf.mxu0
    %v801 = vadd.f32 %v490, %v800
    %802 = vmatprep.mubr.f32.mxu0 0.0
    %803 = vmatmul.mubr.f32.gmra.mxu0 %v440
    %v804 = vpop.f32.mrf.mxu0
    %v805 = vadd.f32 %v495, %v804
    %v806 = vpop.f32.mrf.mxu0
    %v807 = vadd.f32 %v495, %v806
    %808 = vmatprep.mubr.f32.mxu0 0.0
    %809 = vmatmul.mubr.f32.gmra.mxu0 %v441
    %v810 = vpop.f32.mrf.mxu0
    %v811 = vadd.f32 %v500, %v810
    %v812 = vpop.f32.mrf.mxu0
    %v813 = vadd.f32 %v500, %v812
    %814 = vmatprep.mubr.f32.mxu0 0.0
    %815 = vmatmul.mubr.f32.gmra.mxu0 %v442
    %v816 = vpop.f32.mrf.mxu0
    %v817 = vadd.f32 %v505, %v816
    %v818 = vpop.f32.mrf.mxu0
    %v819 = vadd.f32 %v505, %v818
    %820 = vmatprep.mubr.f32.mxu0 0.0
    %821 = vmatmul.mubr.f32.gmra.mxu0 %v443
    %v822 = vpop.f32.mrf.mxu0
    %v823 = vadd.f32 %v510, %v822
    %v824 = vpop.f32.mrf.mxu0
    %v825 = vadd.f32 %v510, %v824
    %826 = vmatprep.mubr.f32.mxu0 0.0
    %827 = vmatmul.mubr.f32.gmra.mxu0 %v444
    %v828 = vpop.f32.mrf.mxu0
    %v829 = vadd.f32 %v515, %v828
    %v830 = vpop.f32.mrf.mxu0
    %v831 = vadd.f32 %v515, %v830
    %832 = vmatprep.mubr.f32.mxu0 0.0
    %833 = vmatmul.mubr.f32.gmra.mxu0 %v445
    %v834 = vpop.f32.mrf.mxu0
    %v835 = vadd.f32 %v520, %v834
    %v836 = vpop.f32.mrf.mxu0
    %v837 = vadd.f32 %v520, %v836
    %838 = vmatprep.mubr.f32.mxu0 0.0
    %839 = vmatmul.mubr.f32.gmra.mxu0 %v446
    %v840 = vpop.f32.mrf.mxu0
    %v841 = vadd.f32 %v525, %v840
    %v842 = vpop.f32.mrf.mxu0
    %v843 = vadd.f32 %v525, %v842
    %844 = vmatprep.mubr.f32.mxu0 0.0
    %845 = vmatmul.mubr.f32.gmra.mxu0 %v447
    %v846 = vpop.f32.mrf.mxu0
    %v847 = vadd.f32 %v530, %v846
    %v848 = vpop.f32.mrf.mxu0
    %v849 = vadd.f32 %v530, %v848
    %850 = vmatprep.mubr.f32.mxu0 0.0
    %851 = vmatmul.mubr.f32.gmra.mxu0 %v448
    %v852 = vpop.f32.mrf.mxu0
    %v853 = vadd.f32 %v535, %v852
    %v854 = vpop.f32.mrf.mxu0
    %v855 = vadd.f32 %v535, %v854
    %856 = vmatprep.mubr.f32.mxu0 0.0
    %857 = vmatmul.mubr.f32.gmra.mxu0 %v449
    %v858 = vpop.f32.mrf.mxu0
    %v859 = vadd.f32 %v540, %v858
    %v860 = vpop.f32.mrf.mxu0
    %v861 = vadd.f32 %v540, %v860
    %862 = vmatprep.mubr.f32.mxu0 0.0
    %863 = vmatmul.mubr.f32.gmra.mxu0 %v450
    %v864 = vpop.f32.mrf.mxu0
    %v865 = vadd.f32 %v545, %v864
    %v866 = vpop.f32.mrf.mxu0
    %v867 = vadd.f32 %v545, %v866
    %868 = vdwg.mxu0
    %v869 = vmax.f32 %v614, 0.0
    %v870 = vmax.f32 %v616, 0.0
    %v871 = vmax.f32 %v775, 0.0
    %v872 = vmax.f32 %v777, 0.0
    %v873 = vmax.f32 %v620, 0.0
    %v874 = vmax.f32 %v622, 0.0
    %v875 = vmax.f32 %v781, 0.0
    %v876 = vmax.f32 %v783, 0.0
    %v877 = vmax.f32 %v626, 0.0
    %v878 = vmax.f32 %v628, 0.0
    %v879 = vmax.f32 %v787, 0.0
    %v880 = vmax.f32 %v789, 0.0
    %v881 = vmax.f32 %v632, 0.0
    %v882 = vmax.f32 %v634, 0.0
    %v883 = vmax.f32 %v793, 0.0
    %v884 = vmax.f32 %v795, 0.0
    %v885 = vmax.f32 %v638, 0.0
    %v886 = vmax.f32 %v640, 0.0
    %v887 = vmax.f32 %v799, 0.0
    %v888 = vmax.f32 %v801, 0.0
    %v889 = vmax.f32 %v644, 0.0
    %v890 = vmax.f32 %v646, 0.0
    %v891 = vmax.f32 %v805, 0.0
    %v892 = vmax.f32 %v807, 0.0
    %v893 = vmax.f32 %v650, 0.0
    %v894 = vmax.f32 %v652, 0.0
    %v895 = vmax.f32 %v811, 0.0
    %v896 = vmax.f32 %v813, 0.0
    %v897 = vmax.f32 %v656, 0.0
    %v898 = vmax.f32 %v658, 0.0
    %v899 = vmax.f32 %v817, 0.0
    %v900 = vmax.f32 %v819, 0.0
    %v901 = vmax.f32 %v662, 0.0
    %v902 = vmax.f32 %v664, 0.0
    %v903 = vmax.f32 %v823, 0.0
    %v904 = vmax.f32 %v825, 0.0
    %v905 = vmax.f32 %v668, 0.0
    %v906 = vmax.f32 %v670, 0.0
    %v907 = vmax.f32 %v829, 0.0
    %v908 = vmax.f32 %v831, 0.0
    %v909 = vmax.f32 %v674, 0.0
    %v910 = vmax.f32 %v676, 0.0
    %v911 = vmax.f32 %v835, 0.0
    %v912 = vmax.f32 %v837, 0.0
    %v913 = vmax.f32 %v680, 0.0
    %v914 = vmax.f32 %v682, 0.0
    %v915 = vmax.f32 %v841, 0.0
    %v916 = vmax.f32 %v843, 0.0
    %v917 = vmax.f32 %v686, 0.0
    %v918 = vmax.f32 %v688, 0.0
    %v919 = vmax.f32 %v847, 0.0
    %v920 = vmax.f32 %v849, 0.0
    %v921 = vmax.f32 %v692, 0.0
    %v922 = vmax.f32 %v694, 0.0
    %v923 = vmax.f32 %v853, 0.0
    %v924 = vmax.f32 %v855, 0.0
    %v925 = vmax.f32 %v698, 0.0
    %v926 = vmax.f32 %v700, 0.0
    %v927 = vmax.f32 %v859, 0.0
    %v928 = vmax.f32 %v861, 0.0
    %v929 = vmax.f32 %v704, 0.0
    %v930 = vmax.f32 %v706, 0.0
    %v931 = vmax.f32 %v865, 0.0
    %v932 = vmax.f32 %v867, 0.0
    %v933 = vld [vmem:[%s5] sm:$0x1]
    %v934 = vld [vmem:[#allocation2] sm:$0x1]
    %936 = vset.pattern.permute.xlu0 0
    %937 = vperm.xlu0 %936, %v934
    %v938 = vpop.permute.xlu0 %937
    %v940 = vlaneseq
    %v941 = vshrl.u32 %v940, 7
    %v942 = vsub.s32 0, %v941
    %v943 = vrot.slane %v938, %v942
    %944 = vmatprep.subr.mxu0 %v930
    %945 = vmatpush1.msra.mxu0 %v929
    %946 = vmatprep.subr.mxu0 %v926
    %947 = vmatpush1.msra.mxu0 %v925
    %948 = vmatprep.subr.mxu0 %v922
    %949 = vmatpush1.msra.mxu0 %v921
    %950 = vmatprep.subr.mxu0 %v918
    %951 = vmatpush1.msra.mxu0 %v917
    %952 = vmatprep.subr.mxu0 %v914
    %953 = vmatpush1.msra.mxu0 %v913
    %954 = vmatprep.subr.mxu0 %v910
    %955 = vmatpush1.msra.mxu0 %v909
    %956 = vmatprep.subr.mxu0 %v906
    %957 = vmatpush1.msra.mxu0 %v905
    %958 = vmatprep.subr.mxu0 %v902
    %959 = vmatpush1.msra.mxu0 %v901
    %960 = vmatprep.subr.mxu0 %v898
    %961 = vmatpush1.msra.mxu0 %v897
    %962 = vmatprep.subr.mxu0 %v894
    %963 = vmatpush1.msra.mxu0 %v893
    %964 = vmatprep.subr.mxu0 %v890
    %965 = vmatpush1.msra.mxu0 %v889
    %966 = vmatprep.subr.mxu0 %v886
    %967 = vmatpush1.msra.mxu0 %v885
    %968 = vmatprep.subr.mxu0 %v882
    %969 = vmatpush1.msra.mxu0 %v881
    %970 = vmatprep.subr.mxu0 %v878
    %971 = vmatpush1.msra.mxu0 %v877
    %972 = vmatprep.subr.mxu0 %v874
    %973 = vmatpush1.msra.mxu0 %v873
    %974 = vmatprep.subr.mxu0 %v870
    %975 = vmatpush1.msra.mxu0 %v869
    %976 = vmatprep.subr.mxu0 0.0
    %977 = vmatpush2.msra.mxu0 0.0
    %978 = vmatprep.subr.mxu0 0.0
    %979 = vmatpush2.msra.mxu0 0.0
    %980 = vmatprep.subr.mxu0 0.0
    %981 = vmatpush2.msra.mxu0 0.0
    %982 = vmatprep.subr.mxu0 0.0
    %983 = vmatpush2.msra.mxu0 0.0
    %984 = vmatprep.subr.mxu0 0.0
    %985 = vmatpush2.msra.mxu0 0.0
    %986 = vmatprep.subr.mxu0 0.0
    %987 = vmatpush2.msra.mxu0 0.0
    %988 = vmatprep.subr.mxu0 0.0
    %989 = vmatpush2.msra.mxu0 0.0
    %990 = vmatprep.subr.mxu0 0.0
    %991 = vmatpush2.msra.mxu0 0.0
    %992 = vmatprep.subr.mxu0 0.0
    %993 = vmatpush2.msra.mxu0 0.0
    %994 = vmatprep.subr.mxu0 0.0
    %995 = vmatpush2.msra.mxu0 0.0
    %996 = vmatprep.subr.mxu0 0.0
    %997 = vmatpush2.msra.mxu0 0.0
    %998 = vmatprep.subr.mxu0 0.0
    %999 = vmatpush2.msra.mxu0 0.0
    %1000 = vmatprep.subr.mxu0 0.0
    %1001 = vmatpush2.msra.mxu0 0.0
    %1002 = vmatprep.subr.mxu0 0.0
    %1003 = vmatpush2.msra.mxu0 0.0
    %1004 = vmatprep.subr.mxu0 0.0
    %1005 = vmatpush2.msra.mxu0 0.0
    %1006 = vmatprep.subr.mxu0 0.0
    %1007 = vmatpush2.msra.mxu0 0.0
    %1008 = vmatprep.mubr.f32.mxu0 0.0
    %1009 = vmatmul.mubr.f32.gmra.mxu0 %v933
    %v1010 = vpop.f32.mrf.mxu0
    %v1011 = vadd.f32 %v943, %v1010
    %v1012 = vpop.f32.mrf.mxu0
    %v1013 = vadd.f32 %v943, %v1012
    %1014 = vdwg.mxu0
    %1015 = vmatprep.subr.mxu0 %v932
    %1016 = vmatpush1.msra.mxu0 %v931
    %1017 = vmatprep.subr.mxu0 %v928
    %1018 = vmatpush1.msra.mxu0 %v927
    %1019 = vmatprep.subr.mxu0 %v924
    %1020 = vmatpush1.msra.mxu0 %v923
    %1021 = vmatprep.subr.mxu0 %v920
    %1022 = vmatpush1.msra.mxu0 %v919
    %1023 = vmatprep.subr.mxu0 %v916
    %1024 = vmatpush1.msra.mxu0 %v915
    %1025 = vmatprep.subr.mxu0 %v912
    %1026 = vmatpush1.msra.mxu0 %v911
    %1027 = vmatprep.subr.mxu0 %v908
    %1028 = vmatpush1.msra.mxu0 %v907
    %1029 = vmatprep.subr.mxu0 %v904
    %1030 = vmatpush1.msra.mxu0 %v903
    %1031 = vmatprep.subr.mxu0 %v900
    %1032 = vmatpush1.msra.mxu0 %v899
    %1033 = vmatprep.subr.mxu0 %v896
    %1034 = vmatpush1.msra.mxu0 %v895
    %1035 = vmatprep.subr.mxu0 %v892
    %1036 = vmatpush1.msra.mxu0 %v891
    %1037 = vmatprep.subr.mxu0 %v888
    %1038 = vmatpush1.msra.mxu0 %v887
    %1039 = vmatprep.subr.mxu0 %v884
    %1040 = vmatpush1.msra.mxu0 %v883
    %1041 = vmatprep.subr.mxu0 %v880
    %1042 = vmatpush1.msra.mxu0 %v879
    %1043 = vmatprep.subr.mxu0 %v876
    %1044 = vmatpush1.msra.mxu0 %v875
    %1045 = vmatprep.subr.mxu0 %v872
    %1046 = vmatpush1.msra.mxu0 %v871
    %1047 = vmatprep.subr.mxu0 0.0
    %1048 = vmatpush2.msra.mxu0 0.0
    %1049 = vmatprep.subr.mxu0 0.0
    %1050 = vmatpush2.msra.mxu0 0.0
    %1051 = vmatprep.subr.mxu0 0.0
    %1052 = vmatpush2.msra.mxu0 0.0
    %1053 = vmatprep.subr.mxu0 0.0
    %1054 = vmatpush2.msra.mxu0 0.0
    %1055 = vmatprep.subr.mxu0 0.0
    %1056 = vmatpush2.msra.mxu0 0.0
    %1057 = vmatprep.subr.mxu0 0.0
    %1058 = vmatpush2.msra.mxu0 0.0
    %1059 = vmatprep.subr.mxu0 0.0
    %1060 = vmatpush2.msra.mxu0 0.0
    %1061 = vmatprep.subr.mxu0 0.0
    %1062 = vmatpush2.msra.mxu0 0.0
    %1063 = vmatprep.subr.mxu0 0.0
    %1064 = vmatpush2.msra.mxu0 0.0
    %1065 = vmatprep.subr.mxu0 0.0
    %1066 = vmatpush2.msra.mxu0 0.0
    %1067 = vmatprep.subr.mxu0 0.0
    %1068 = vmatpush2.msra.mxu0 0.0
    %1069 = vmatprep.subr.mxu0 0.0
    %1070 = vmatpush2.msra.mxu0 0.0
    %1071 = vmatprep.subr.mxu0 0.0
    %1072 = vmatpush2.msra.mxu0 0.0
    %1073 = vmatprep.subr.mxu0 0.0
    %1074 = vmatpush2.msra.mxu0 0.0
    %1075 = vmatprep.subr.mxu0 0.0
    %1076 = vmatpush2.msra.mxu0 0.0
    %1077 = vmatprep.subr.mxu0 0.0
    %1078 = vmatpush2.msra.mxu0 0.0
    %1079 = vmatprep.mubr.f32.mxu0 0.0
    %1080 = vmatmul.mubr.f32.gmra.mxu0 %v933
    %v1081 = vpop.f32.mrf.mxu0
    %v1082 = vadd.f32 %v943, %v1081
    %v1083 = vpop.f32.mrf.mxu0
    %v1084 = vadd.f32 %v943, %v1083
    %1085 = vdwg.mxu0
    %v1090 = vcombine.low %v1011, %v1013
    %v1091 = vcombine.low %v1082, %v1084
    %v1093 = vunpack.c.l.s4 1966171168
    %v1094 = vunpack.c.0.s8 %v1093
    %v1095 = vlaneseq
    %v1096 = vshrl.u32 %v1095, 7
    %v1097 = vsub.s32 %v1094, %v1096
    %v1098 = vrot.slane %v1090, %v1097
    %v1100 = vunpack.c.l.s4 1966171168
    %v1101 = vunpack.c.0.s8 %v1100
    %v1102 = vlaneseq
    %v1103 = vshrl.u32 %v1102, 7
    %v1104 = vsub.s32 %v1101, %v1103
    %v1105 = vrot.slane %v1091, %v1104
    %v1106 = vcombine.low %v1098, %v1105
    %v1108 = vunpack.c.l.s4 1966171168
    %v1109 = vunpack.c.0.s8 %v1108
    %v1110 = vlaneseq
    %v1111 = vshrl.u32 %v1110, 7
    %v1112 = vsub.s32 %v1109, %v1111
    %v1113 = vrot.slane %v1106, %v1112
    %v1115 = vlaneseq
    %vm1116 = vcmp.ge.s32.totalorder %v1115, 0
    %vm1117 = vcmp.lt.s32.totalorder %v1115, 512
    %vm1118 = vmand %vm1116, %vm1117
    %1119 = vst.msk [vmem:[#allocation3] sm:$0xf] %vm1118, %v1113
    // Predicated region
    $region30: #{tpu_custom_call.1} parent=1 // pred_check
      _
    $region31: #{tpu_custom_call.1} parent=1 // pred_check_branch
      %1121 = sbr.rel (0) target = $region33
    $region32: #{tpu_custom_call.1} parent=1 // pred_region
      %s1123 = ssub.s32 64, 64
      %1124 = vsyncadd [#allocation4], %s1123
      %s1126 = sshll.u32 [#allocation3], 4
      %s1127 = int_to_ptr.vmem [resolvable:$true] %s1126
      %1129 = dma.vmem_to_hbm [thread:$0]  %s1127, 64, %s7, [#allocation4]
    $region33: #{tpu_custom_call.1} parent=1 // pred_fallthru
      _
    // Predicated region
    $region34: #{tpu_custom_call.1} parent=1 // pred_check
      _
    $region35: #{tpu_custom_call.1} parent=1 // pred_check_branch
      %1131 = sbr.rel (0) target = $region37
    $region36: #{tpu_custom_call.1} parent=1 // pred_region
      %1132 = dma.done [#allocation4], 64
    $region37: #{tpu_custom_call.1} parent=1 // pred_fallthru
      _
    %1133 = vsyncpa [#allocation4], 1

</llo_original>
